<compile_context>
chip_gen: v6e
topology: v6e:2x2x1
jax: 0.10.0
libtpu: 0.0.40
codegen_flags: <defaults>
</compile_context>

<pallas_src>
import functools

import jax
import jax.numpy as jnp
from jax.experimental import pallas as pl
from jax.experimental.pallas import tpu as pltpu

_LANE = 128


def _round_up(x, m):
    return ((x + m - 1) // m) * m


# ----------------------------- Pallas kernel --------------------------------

def _gcn_fused_kernel(n_layers, adj_ref, feat_ref, *refs):
    """Entire GCN forward in one kernel; all operands resident in VMEM.

    refs = (w_0..w_{L-1}, shift_0..shift_{L-1}, out)
    w_i (bf16) already has the eval-mode BatchNorm scale folded in; shift_i
    (f32) is the remaining per-feature shift (bias for the last layer).
    """
    w_refs = refs[:n_layers]
    shift_refs = refs[n_layers:2 * n_layers]
    o_ref = refs[2 * n_layers]

    adj = adj_ref[...]          # bf16 (Np, Np)
    h = feat_ref[...]           # bf16 (Np, F0p)
    for i in range(n_layers):
        # NOTE: at padded sizes all feature dims are 128 so reassociating
        # layer 0 as (A@h)@W0 saves nothing here; for real OGB graphs pick
        # the ordering minimizing N^2 * F per layer.
        xw = jnp.dot(h, w_refs[i][...], preferred_element_type=jnp.float32)
        agg = jnp.dot(adj, xw.astype(jnp.bfloat16),
                      preferred_element_type=jnp.float32)
        hf = agg + shift_refs[i][...]          # f32 shift-add on the VPU
        if i < n_layers - 1:
            hf = jnp.maximum(hf, 0.0)          # ReLU; dropout = identity (eval)
            h = hf.astype(jnp.bfloat16)        # bf16 for the next MXU pass
        else:
            h = hf
    o_ref[...] = h.astype(o_ref.dtype)


# --------------------- one-time host-side parameter prep ---------------------

def fold_and_pad_params(params, *, eps=1e-5):
    """Fold eval-BN scale into W, zero-pad feature dims to 128 multiples,
    cast weights to bf16.  Run ONCE, outside the per-inference path."""
    n_layers = len(params)
    dims = [params[0]["w"].shape[0]] + [p["w"].shape[1] for p in params]
    dims_p = [_round_up(d, _LANE) for d in dims]

    ws, shifts = [], []
    for i, layer in enumerate(params):
        w = layer["w"].astype(jnp.float32)
        if i < n_layers - 1:
            inv_std = 1.0 / jnp.sqrt(layer["running_var"] + eps)
            scale = layer["gamma"] * inv_std
            shift = layer["beta"] - layer["gamma"] * layer["running_mean"] * inv_std
            # A @ (H@W) * scale == A @ (H @ (W*scale)) since A mixes nodes only.
            w = w * scale[None, :]
        else:
            shift = layer["bias"]
        wp = jnp.pad(w, ((0, dims_p[i] - w.shape[0]),
                         (0, dims_p[i + 1] - w.shape[1])))
        sp = jnp.pad(shift[None, :].astype(jnp.float32),
                     ((0, 0), (0, dims_p[i + 1] - shift.shape[0])))
        ws.append(wp.astype(jnp.bfloat16))
        shifts.append(sp)
    return tuple(ws), tuple(shifts)


# ----------------------------- jitted forward --------------------------------

@functools.partial(jax.jit, static_argnames=("n_classes",))
def _gcn_forward_jit(adj_norm, feat, ws, shifts, *, n_classes):
    n_layers = len(ws)
    N = adj_norm.shape[0]
    n_pad = _round_up(N, _LANE)
    dims_p = [ws[0].shape[0]] + [w.shape[1] for w in ws]

    adj_p = jnp.pad(adj_norm.astype(jnp.float32),
                    ((0, n_pad - N), (0, n_pad - N))).astype(jnp.bfloat16)
    feat_p = jnp.pad(feat.astype(jnp.float32),
                     ((0, n_pad - N), (0, dims_p[0] - feat.shape[1]))
                     ).astype(jnp.bfloat16)

    # --- VMEM budget: single-buffered (no grid => no pipeline buffers) -------
    resident = (adj_p.size * adj_p.dtype.itemsize
                + feat_p.size * feat_p.dtype.itemsize
                + sum(w.size * w.dtype.itemsize for w in ws)
                + sum(s.size * s.dtype.itemsize for s in shifts)
                + n_pad * dims_p[-1] * 4)                  # f32 output
    temps = 3 * n_pad * max(dims_p) * 4                    # xw / agg / h (f32)
    footprint = resident + temps

    try:
        vmem_cap = pltpu.get_tpu_info().vmem_capacity_bytes
    except Exception:
        vmem_cap = 64 << 20   # conservative fallback (v7x per-TC VMEM)
    if footprint > (9 * vmem_cap) // 10:
        # TODO(synk): switch to the row-tiled path that streams adj tiles.
        raise NotImplementedError(
            "graph too large for the fully VMEM-resident fused GCN path")

    vmem_limit = int(min(max(2 * footprint, 16 << 20), vmem_cap))

    kernel = functools.partial(_gcn_fused_kernel, n_layers)
    vmem_spec = pl.BlockSpec(memory_space=pltpu.MemorySpace.VMEM)

    out_p = pl.pallas_call(
        kernel,
        out_shape=jax.ShapeDtypeStruct((n_pad, dims_p[-1]), jnp.float32),
        in_specs=[vmem_spec] * (2 + 2 * n_layers),
        out_specs=vmem_spec,
        compiler_params=pltpu.CompilerParams(vmem_limit_bytes=vmem_limit),
    )(adj_p, feat_p, *ws, *shifts)

    return out_p[:N, :n_classes]


def ogb_gcn_forward(adj_norm, feat, folded, n_classes):
    ws, shifts = folded
    return _gcn_forward_jit(adj_norm, feat, ws, shifts, n_classes=n_classes)


# ----------------------------- params / references ---------------------------

def init_params(key, in_feats, n_hidden, n_classes, n_layers):
    params = []
    for i in range(n_layers):
        in_h = n_hidden if i > 0 else in_feats
        out_h = n_hidden if i < n_layers - 1 else n_classes
        key, kw, kb, kg, kbeta = jax.random.split(key, 5)
        w = jax.random.normal(kw, (in_h, out_h), jnp.float32) * (2.0 / (in_h + out_h)) ** 0.5
        layer = {"w": w}
        if i == n_layers - 1:
            layer["bias"] = jax.random.normal(kb, (out_h,), jnp.float32) * 0.01
        else:
            layer["gamma"] = 1.0 + 0.1 * jax.random.normal(kg, (out_h,), jnp.float32)
            layer["beta"] = 0.1 * jax.random.normal(kbeta, (out_h,), jnp.float32)
            layer["running_mean"] = jnp.zeros((out_h,), jnp.float32)
            layer["running_var"] = jnp.ones((out_h,), jnp.float32)
        params.append(layer)
    return params


def ogb_gcn_reference(adj_norm, feat, params, *, eps=1e-5):
    """Pure f32 eval-mode reference."""
    n_layers = len(params)
    h = feat
    for i, layer in enumerate(params):
        h = adj_norm @ (h @ layer["w"])
        if i < n_layers - 1:
            inv_std = 1.0 / jnp.sqrt(layer["running_var"] + eps)
            h = (h - layer["running_mean"]) * inv_std * layer["gamma"] + layer["beta"]
            h = jnp.maximum(h, 0.0)
        else:
            h = h + layer["bias"]
    return h


def ogb_gcn_reference_bf16(adj_norm, feat, params, *, eps=1e-5):
    """Mirrors the kernel's arithmetic: BN folded into W, bf16 MXU inputs,
    f32 accumulation, f32 shift/ReLU."""
    n_layers = len(params)
    a = adj_norm.astype(jnp.bfloat16)
    h = feat.astype(jnp.bfloat16)
    hf = None
    for i, layer in enumerate(params):
        w = layer["w"].astype(jnp.float32)
        if i < n_layers - 1:
            inv_std = 1.0 / jnp.sqrt(layer["running_var"] + eps)
            scale = layer["gamma"] * inv_std
            shift = layer["beta"] - layer["gamma"] * layer["running_mean"] * inv_std
            w = w * scale[None, :]
        else:
            shift = layer["bias"]
        xw = jnp.dot(h, w.astype(jnp.bfloat16), preferred_element_type=jnp.float32)
        agg = jnp.dot(a, xw.astype(jnp.bfloat16), preferred_element_type=jnp.float32)
        hf = agg + shift[None, :].astype(jnp.float32)
        if i < n_layers - 1:
            h = jnp.maximum(hf, 0.0).astype(jnp.bfloat16)
    return hf


# ----------------------------- main -------------------------------------------

if __name__ == "__main__":
    key = jax.random.PRNGKey(0)
    N = 128          # num graph nodes
    in_feats = 16
    n_hidden = 32
    n_classes = 8
    n_layers = 3

    key, k_adj, k_feat, k_par = jax.random.split(key, 4)

    # Deterministic random undirected graph, no self loops, symmetric norm.
    a = (jax.random.uniform(k_adj, (N, N)) < 0.1).astype(jnp.float32)
    a = jnp.maximum(a, a.T)
    a = a * (1.0 - jnp.eye(N, dtype=jnp.float32))
    deg = jnp.maximum(a.sum(axis=1), 1.0)          # DGL clamps degree to >= 1
    d_inv_sqrt = deg ** -0.5
    adj_norm = d_inv_sqrt[:, None] * a * d_inv_sqrt[None, :]

    feat = jax.random.normal(k_feat, (N, in_feats), jnp.float32)
    params = init_params(k_par, in_feats, n_hidden, n_classes, n_layers)

    folded = fold_and_pad_params(params)            # one-time setup, hoisted
    out = ogb_gcn_forward(adj_norm, feat, folded, n_classes)
    out = jax.block_until_ready(out)
    assert out.shape == (N, n_classes), out.shape

    # Tight check vs. a reference doing the SAME bf16-MXU / f32-acc math.
    ref_bf16 = ogb_gcn_reference_bf16(adj_norm, feat, params)
    err_matched = float(jnp.max(jnp.abs(out - ref_bf16)))
    assert jnp.allclose(out, ref_bf16, atol=2e-3, rtol=2e-3), err_matched

    # Looser sanity check vs. the pure-f32 reference (bf16 MXU inputs lose
    # ~3 decimal digits over 128-neighbor aggregations).
    ref_f32 = ogb_gcn_reference(adj_norm, feat, params)
    err_f32 = float(jnp.max(jnp.abs(out - ref_f32)))
    assert jnp.allclose(out, ref_f32, atol=1e-2, rtol=5e-2), err_f32

    print("KERNEL_OK")
</pallas_src>

<mosaic_0001>
module attributes {stable_mosaic.version = 11 : i64} {
  func.func @_gcn_fused_kernel(%arg0: memref<128x128xbf16, #tpu.memory_space<vmem>>, %arg1: memref<128x128xbf16, #tpu.memory_space<vmem>>, %arg2: memref<128x128xbf16, #tpu.memory_space<vmem>>, %arg3: memref<128x128xbf16, #tpu.memory_space<vmem>>, %arg4: memref<128x128xbf16, #tpu.memory_space<vmem>>, %arg5: memref<1x128xf32, #tpu.memory_space<vmem>>, %arg6: memref<1x128xf32, #tpu.memory_space<vmem>>, %arg7: memref<1x128xf32, #tpu.memory_space<vmem>>, %arg8: memref<128x128xf32, #tpu.memory_space<vmem>>) attributes {dimension_semantics = [], scalar_prefetch = 0 : i64, scratch_operands = 0 : i64, tpu.core_type = #tpu.core_type<tc>} {
    %c0 = arith.constant 0 : index
    %c0_0 = arith.constant 0 : index
    %0 = vector.load %arg0[%c0, %c0_0] : memref<128x128xbf16, #tpu.memory_space<vmem>>, vector<128x128xbf16>
    %c0_1 = arith.constant 0 : index
    %c0_2 = arith.constant 0 : index
    %1 = vector.load %arg1[%c0_1, %c0_2] : memref<128x128xbf16, #tpu.memory_space<vmem>>, vector<128x128xbf16>
    %c0_3 = arith.constant 0 : index
    %c0_4 = arith.constant 0 : index
    %2 = vector.load %arg2[%c0_3, %c0_4] : memref<128x128xbf16, #tpu.memory_space<vmem>>, vector<128x128xbf16>
    %cst = arith.constant dense<0.000000e+00> : vector<128x128xf32>
    %3 = tpu.matmul %1, %2, %cst {dimension_numbers = #tpu.dot_dimension_numbers<[1], [0], [0], [1], [0, 0, 1, 1], [], []>} : vector<128x128xbf16>, vector<128x128xbf16>, vector<128x128xf32> -> vector<128x128xf32>
    %4 = arith.truncf %3 : vector<128x128xf32> to vector<128x128xbf16>
    %cst_5 = arith.constant dense<0.000000e+00> : vector<128x128xf32>
    %5 = tpu.matmul %0, %4, %cst_5 {dimension_numbers = #tpu.dot_dimension_numbers<[1], [0], [0], [1], [0, 0, 1, 1], [], []>} : vector<128x128xbf16>, vector<128x128xbf16>, vector<128x128xf32> -> vector<128x128xf32>
    %c0_6 = arith.constant 0 : index
    %c0_7 = arith.constant 0 : index
    %6 = vector.load %arg5[%c0_6, %c0_7] : memref<1x128xf32, #tpu.memory_space<vmem>>, vector<1x128xf32>
    %7 = vector.broadcast %6 : vector<1x128xf32> to vector<128x128xf32>
    %8 = arith.addf %5, %7 : vector<128x128xf32>
    %cst_8 = arith.constant 0.000000e+00 : f32
    %9 = vector.broadcast %cst_8 : f32 to vector<128x128xf32>
    %10 = arith.maximumf %8, %9 : vector<128x128xf32>
    %11 = arith.truncf %10 : vector<128x128xf32> to vector<128x128xbf16>
    %c0_9 = arith.constant 0 : index
    %c0_10 = arith.constant 0 : index
    %12 = vector.load %arg3[%c0_9, %c0_10] : memref<128x128xbf16, #tpu.memory_space<vmem>>, vector<128x128xbf16>
    %cst_11 = arith.constant dense<0.000000e+00> : vector<128x128xf32>
    %13 = tpu.matmul %11, %12, %cst_11 {dimension_numbers = #tpu.dot_dimension_numbers<[1], [0], [0], [1], [0, 0, 1, 1], [], []>} : vector<128x128xbf16>, vector<128x128xbf16>, vector<128x128xf32> -> vector<128x128xf32>
    %14 = arith.truncf %13 : vector<128x128xf32> to vector<128x128xbf16>
    %cst_12 = arith.constant dense<0.000000e+00> : vector<128x128xf32>
    %15 = tpu.matmul %0, %14, %cst_12 {dimension_numbers = #tpu.dot_dimension_numbers<[1], [0], [0], [1], [0, 0, 1, 1], [], []>} : vector<128x128xbf16>, vector<128x128xbf16>, vector<128x128xf32> -> vector<128x128xf32>
    %c0_13 = arith.constant 0 : index
    %c0_14 = arith.constant 0 : index
    %16 = vector.load %arg6[%c0_13, %c0_14] : memref<1x128xf32, #tpu.memory_space<vmem>>, vector<1x128xf32>
    %17 = vector.broadcast %16 : vector<1x128xf32> to vector<128x128xf32>
    %18 = arith.addf %15, %17 : vector<128x128xf32>
    %cst_15 = arith.constant 0.000000e+00 : f32
    %19 = vector.broadcast %cst_15 : f32 to vector<128x128xf32>
    %20 = arith.maximumf %18, %19 : vector<128x128xf32>
    %21 = arith.truncf %20 : vector<128x128xf32> to vector<128x128xbf16>
    %c0_16 = arith.constant 0 : index
    %c0_17 = arith.constant 0 : index
    %22 = vector.load %arg4[%c0_16, %c0_17] : memref<128x128xbf16, #tpu.memory_space<vmem>>, vector<128x128xbf16>
    %cst_18 = arith.constant dense<0.000000e+00> : vector<128x128xf32>
    %23 = tpu.matmul %21, %22, %cst_18 {dimension_numbers = #tpu.dot_dimension_numbers<[1], [0], [0], [1], [0, 0, 1, 1], [], []>} : vector<128x128xbf16>, vector<128x128xbf16>, vector<128x128xf32> -> vector<128x128xf32>
    %24 = arith.truncf %23 : vector<128x128xf32> to vector<128x128xbf16>
    %cst_19 = arith.constant dense<0.000000e+00> : vector<128x128xf32>
    %25 = tpu.matmul %0, %24, %cst_19 {dimension_numbers = #tpu.dot_dimension_numbers<[1], [0], [0], [1], [0, 0, 1, 1], [], []>} : vector<128x128xbf16>, vector<128x128xbf16>, vector<128x128xf32> -> vector<128x128xf32>
    %c0_20 = arith.constant 0 : index
    %c0_21 = arith.constant 0 : index
    %26 = vector.load %arg7[%c0_20, %c0_21] : memref<1x128xf32, #tpu.memory_space<vmem>>, vector<1x128xf32>
    %27 = vector.broadcast %26 : vector<1x128xf32> to vector<128x128xf32>
    %28 = arith.addf %25, %27 : vector<128x128xf32>
    %c0_22 = arith.constant 0 : index
    %c0_23 = arith.constant 0 : index
    %29 = vector.load %arg8[%c0_22, %c0_23] : memref<128x128xf32, #tpu.memory_space<vmem>>, vector<128x128xf32>
    tpu.vector_store %arg8[%c0_22, %c0_23], %28 {strides = array<i32>} : memref<128x128xf32, #tpu.memory_space<vmem>>, vector<128x128xf32>,
    return
  }
}

</mosaic_0001>

<llo_original>
// kernel: _gcn_forward_jit.1
$region0: #{_gcn_forward_jit.1}
  #allocation0 [shape = 'u32[]', space=smem, size = 0x4, offset = 0x4, fixed_abs, tag = 'smem constant byte address 0x4 - core index']
  #allocation1 [shape = 'u32[144,128]{1,0:T(1,128)}', space=vmem, size = 0x12000, scoped, tag = 'internal scratch']
  %s0 = inlined_call_operand.vmem [shape: bf16[128,128], index: 0, kind: input, shape index: {}]
  %s1 = inlined_call_operand.vmem [shape: bf16[128,128], index: 1, kind: input, shape index: {}]
  %s2 = inlined_call_operand.vmem [shape: bf16[128,128], index: 2, kind: input, shape index: {}]
  %s3 = inlined_call_operand.vmem [shape: bf16[128,128], index: 3, kind: input, shape index: {}]
  %s4 = inlined_call_operand.vmem [shape: bf16[128,128], index: 4, kind: input, shape index: {}]
  %s5 = inlined_call_operand.vmem [shape: f32[1,128], index: 5, kind: input, shape index: {}]
  %s6 = inlined_call_operand.vmem [shape: f32[1,128], index: 6, kind: input, shape index: {}]
  %s7 = inlined_call_operand.vmem [shape: f32[1,128], index: 7, kind: input, shape index: {}]
  %s8 = inlined_call_operand.vmem [shape: f32[128,128], index: 8, kind: output, shape index: {}]
  %s9 = sld [smem:[#allocation0]]
  $region42: #{_gcn_forward_jit.1} parent=0
    _
  %s11 = ssub.s32 1, %s9
  %s12 = scalar_select 0, %s11, %s9
  // Predicated region
  $region2: #{_gcn_forward_jit.1} parent=0 // pred_check
    _
  $region3: #{_gcn_forward_jit.1} parent=0 // pred_check_branch
    %14 = sbr.rel (0) target = $region5
  $region4: #{_gcn_forward_jit.1} parent=0 // pred_region
    _
  $region5: #{_gcn_forward_jit.1} parent=0 // pred_fallthru
    _
  // Predicated region
  $region6: #{_gcn_forward_jit.1} parent=0 // pred_check
    _
  $region7: #{_gcn_forward_jit.1} parent=0 // pred_check_branch
    %16 = sbr.rel (0) target = $region9
  $region8: #{_gcn_forward_jit.1} parent=0 // pred_region
    _
  $region9: #{_gcn_forward_jit.1} parent=0 // pred_fallthru
    _
  // Predicated region
  $region10: #{_gcn_forward_jit.1} parent=0 // pred_check
    _
  $region11: #{_gcn_forward_jit.1} parent=0 // pred_check_branch
    %18 = sbr.rel (0) target = $region13
  $region12: #{_gcn_forward_jit.1} parent=0 // pred_region
    _
  $region13: #{_gcn_forward_jit.1} parent=0 // pred_fallthru
    _
  // Predicated region
  $region14: #{_gcn_forward_jit.1} parent=0 // pred_check
    _
  $region15: #{_gcn_forward_jit.1} parent=0 // pred_check_branch
    %20 = sbr.rel (0) target = $region17
  $region16: #{_gcn_forward_jit.1} parent=0 // pred_region
    _
  $region17: #{_gcn_forward_jit.1} parent=0 // pred_fallthru
    _
  // Predicated region
  $region18: #{_gcn_forward_jit.1} parent=0 // pred_check
    _
  $region19: #{_gcn_forward_jit.1} parent=0 // pred_check_branch
    %22 = sbr.rel (0) target = $region21
  $region20: #{_gcn_forward_jit.1} parent=0 // pred_region
    _
  $region21: #{_gcn_forward_jit.1} parent=0 // pred_fallthru
    _
  // Predicated region
  $region22: #{_gcn_forward_jit.1} parent=0 // pred_check
    _
  $region23: #{_gcn_forward_jit.1} parent=0 // pred_check_branch
    %24 = sbr.rel (0) target = $region25
  $region24: #{_gcn_forward_jit.1} parent=0 // pred_region
    _
  $region25: #{_gcn_forward_jit.1} parent=0 // pred_fallthru
    _
  // Predicated region
  $region26: #{_gcn_forward_jit.1} parent=0 // pred_check
    _
  $region27: #{_gcn_forward_jit.1} parent=0 // pred_check_branch
    %26 = sbr.rel (0) target = $region29
  $region28: #{_gcn_forward_jit.1} parent=0 // pred_region
    _
  $region29: #{_gcn_forward_jit.1} parent=0 // pred_fallthru
    _
  // Predicated region
  $region30: #{_gcn_forward_jit.1} parent=0 // pred_check
    _
  $region31: #{_gcn_forward_jit.1} parent=0 // pred_check_branch
    %28 = sbr.rel (0) target = $region33
  $region32: #{_gcn_forward_jit.1} parent=0 // pred_region
    _
  $region33: #{_gcn_forward_jit.1} parent=0 // pred_fallthru
    _
  %v30 = vld [vmem:[%s0] sm:$0xf]
  %v31 = vld [vmem:[%s0 + $0x4] sm:$0xf]
  %v32 = vld [vmem:[%s0 + $0x8] sm:$0xf]
  %v33 = vld [vmem:[%s0 + $0xc] sm:$0xf]
  %v34 = vld [vmem:[%s0 + $0x10] sm:$0xf]
  %v35 = vld [vmem:[%s0 + $0x14] sm:$0xf]
  %v36 = vld [vmem:[%s0 + $0x18] sm:$0xf]
  %v37 = vld [vmem:[%s0 + $0x1c] sm:$0xf]
  %v38 = vld [vmem:[%s0 + $0x20] sm:$0xf]
  %v39 = vld [vmem:[%s0 + $0x24] sm:$0xf]
  %v40 = vld [vmem:[%s0 + $0x28] sm:$0xf]
  %v41 = vld [vmem:[%s0 + $0x2c] sm:$0xf]
  %v42 = vld [vmem:[%s0 + $0x30] sm:$0xf]
  %v43 = vld [vmem:[%s0 + $0x34] sm:$0xf]
  %v44 = vld [vmem:[%s0 + $0x38] sm:$0xf]
  %v45 = vld [vmem:[%s0 + $0x3c] sm:$0xf]
  %v46 = vld [vmem:[%s1] sm:$0xf]
  %v47 = vld [vmem:[%s1 + $0x4] sm:$0xf]
  %v48 = vld [vmem:[%s1 + $0x8] sm:$0xf]
  %v49 = vld [vmem:[%s1 + $0xc] sm:$0xf]
  %v50 = vld [vmem:[%s1 + $0x10] sm:$0xf]
  %v51 = vld [vmem:[%s1 + $0x14] sm:$0xf]
  %v52 = vld [vmem:[%s1 + $0x18] sm:$0xf]
  %v53 = vld [vmem:[%s1 + $0x1c] sm:$0xf]
  %v54 = vld [vmem:[%s1 + $0x20] sm:$0xf]
  %v55 = vld [vmem:[%s1 + $0x24] sm:$0xf]
  %v56 = vld [vmem:[%s1 + $0x28] sm:$0xf]
  %v57 = vld [vmem:[%s1 + $0x2c] sm:$0xf]
  %v58 = vld [vmem:[%s1 + $0x30] sm:$0xf]
  %v59 = vld [vmem:[%s1 + $0x34] sm:$0xf]
  %v60 = vld [vmem:[%s1 + $0x38] sm:$0xf]
  %v61 = vld [vmem:[%s1 + $0x3c] sm:$0xf]
  %v62 = vld [vmem:[%s2] sm:$0xf]
  %v63 = vld [vmem:[%s2 + $0x4] sm:$0xf]
  %v64 = vld [vmem:[%s2 + $0x8] sm:$0xf]
  %v65 = vld [vmem:[%s2 + $0xc] sm:$0xf]
  %v66 = vld [vmem:[%s2 + $0x10] sm:$0xf]
  %v67 = vld [vmem:[%s2 + $0x14] sm:$0xf]
  %v68 = vld [vmem:[%s2 + $0x18] sm:$0xf]
  %v69 = vld [vmem:[%s2 + $0x1c] sm:$0xf]
  %v70 = vld [vmem:[%s2 + $0x20] sm:$0xf]
  %v71 = vld [vmem:[%s2 + $0x24] sm:$0xf]
  %v72 = vld [vmem:[%s2 + $0x28] sm:$0xf]
  %v73 = vld [vmem:[%s2 + $0x2c] sm:$0xf]
  %v74 = vld [vmem:[%s2 + $0x30] sm:$0xf]
  %v75 = vld [vmem:[%s2 + $0x34] sm:$0xf]
  %v76 = vld [vmem:[%s2 + $0x38] sm:$0xf]
  %v77 = vld [vmem:[%s2 + $0x3c] sm:$0xf]
  %v94 = vunpack.c.l.b16 %v46
  %v95 = vunpack.c.l.b16 %v47
  %v96 = vunpack.c.l.b16 %v48
  %v97 = vunpack.c.l.b16 %v49
  %v98 = vunpack.c.l.b16 %v50
  %v99 = vunpack.c.l.b16 %v51
  %v100 = vunpack.c.l.b16 %v52
  %v101 = vunpack.c.l.b16 %v53
  %v102 = vunpack.c.l.b16 %v54
  %v103 = vunpack.c.l.b16 %v55
  %v104 = vunpack.c.l.b16 %v56
  %v105 = vunpack.c.l.b16 %v57
  %v106 = vunpack.c.l.b16 %v58
  %v107 = vunpack.c.l.b16 %v59
  %v108 = vunpack.c.l.b16 %v60
  %v109 = vunpack.c.l.b16 %v61
  %v110 = vpack.c.b16 %v95, %v94
  %v111 = vpack.c.b16 %v97, %v96
  %v112 = vpack.c.b16 %v99, %v98
  %v113 = vpack.c.b16 %v101, %v100
  %v114 = vpack.c.b16 %v103, %v102
  %v115 = vpack.c.b16 %v105, %v104
  %v116 = vpack.c.b16 %v107, %v106
  %v117 = vpack.c.b16 %v109, %v108
  %v142 = vunpack.c.l.b16 %v62
  %v143 = vunpack.c.l.b16 %v63
  %v144 = vunpack.c.l.b16 %v64
  %v145 = vunpack.c.l.b16 %v65
  %v146 = vunpack.c.l.b16 %v66
  %v147 = vunpack.c.l.b16 %v67
  %v148 = vunpack.c.l.b16 %v68
  %v149 = vunpack.c.l.b16 %v69
  %v150 = vunpack.c.l.b16 %v70
  %v151 = vunpack.c.l.b16 %v71
  %v152 = vunpack.c.l.b16 %v72
  %v153 = vunpack.c.l.b16 %v73
  %v154 = vunpack.c.l.b16 %v74
  %v155 = vunpack.c.l.b16 %v75
  %v156 = vunpack.c.l.b16 %v76
  %v157 = vunpack.c.l.b16 %v77
  %v158 = vpack.c.b16 %v143, %v142
  %v159 = vpack.c.b16 %v145, %v144
  %v160 = vpack.c.b16 %v147, %v146
  %v161 = vpack.c.b16 %v149, %v148
  %v162 = vpack.c.b16 %v151, %v150
  %v163 = vpack.c.b16 %v153, %v152
  %v164 = vpack.c.b16 %v155, %v154
  %v165 = vpack.c.b16 %v157, %v156
  %174 = vmatprep.subr.bf16.mxu0 0
  %175 = vmatpush1.bf16.msra.mxu0 %v165
  %176 = vmatprep.subr.bf16.mxu0 0
  %177 = vmatpush1.bf16.msra.mxu0 %v164
  %178 = vmatprep.subr.bf16.mxu0 0
  %179 = vmatpush1.bf16.msra.mxu0 %v163
  %180 = vmatprep.subr.bf16.mxu0 0
  %181 = vmatpush1.bf16.msra.mxu0 %v162
  %182 = vmatprep.subr.bf16.mxu0 0
  %183 = vmatpush1.bf16.msra.mxu0 %v161
  %184 = vmatprep.subr.bf16.mxu0 0
  %185 = vmatpush1.bf16.msra.mxu0 %v160
  %186 = vmatprep.subr.bf16.mxu0 0
  %187 = vmatpush1.bf16.msra.mxu0 %v159
  %188 = vmatprep.subr.bf16.mxu0 0
  %189 = vmatpush1.bf16.msra.mxu0 %v158
  %190 = vmatprep.subr.bf16.mxu0 0
  %191 = vmatpush2.bf16.msra.mxu0 0
  %192 = vmatprep.subr.bf16.mxu0 0
  %193 = vmatpush2.bf16.msra.mxu0 0
  %194 = vmatprep.subr.bf16.mxu0 0
  %195 = vmatpush2.bf16.msra.mxu0 0
  %196 = vmatprep.subr.bf16.mxu0 0
  %197 = vmatpush2.bf16.msra.mxu0 0
  %198 = vmatprep.subr.bf16.mxu0 0
  %199 = vmatpush2.bf16.msra.mxu0 0
  %200 = vmatprep.subr.bf16.mxu0 0
  %201 = vmatpush2.bf16.msra.mxu0 0
  %202 = vmatprep.subr.bf16.mxu0 0
  %203 = vmatpush2.bf16.msra.mxu0 0
  %204 = vmatprep.subr.bf16.mxu0 0
  %205 = vmatpush2.bf16.msra.mxu0 0
  %206 = vmatprep.mubr.bf16.mxu0 0
  %207 = vmatmul.mubr.bf16.gmra.mxu0 %v110
  %v208 = vpop.f32.mrf.mxu0
  %v209 = vadd.f32 0.0, %v208
  %v210 = vpop.f32.mrf.mxu0
  %v211 = vpop.f32.mrf.mxu0
  %v212 = vadd.f32 0.0, %v211
  %v213 = vpop.f32.mrf.mxu0
  %214 = vmatprep.mubr.bf16.mxu0 0
  %215 = vmatmul.mubr.bf16.gmra.mxu0 %v111
  %v216 = vpop.f32.mrf.mxu0
  %v217 = vadd.f32 0.0, %v216
  %v218 = vpop.f32.mrf.mxu0
  %v219 = vpop.f32.mrf.mxu0
  %v220 = vadd.f32 0.0, %v219
  %v221 = vpop.f32.mrf.mxu0
  %222 = vmatprep.mubr.bf16.mxu0 0
  %223 = vmatmul.mubr.bf16.gmra.mxu0 %v112
  %v224 = vpop.f32.mrf.mxu0
  %v225 = vadd.f32 0.0, %v224
  %v226 = vpop.f32.mrf.mxu0
  %v227 = vpop.f32.mrf.mxu0
  %v228 = vadd.f32 0.0, %v227
  %v229 = vpop.f32.mrf.mxu0
  %230 = vmatprep.mubr.bf16.mxu0 0
  %231 = vmatmul.mubr.bf16.gmra.mxu0 %v113
  %v232 = vpop.f32.mrf.mxu0
  %v233 = vadd.f32 0.0, %v232
  %v234 = vpop.f32.mrf.mxu0
  %v235 = vpop.f32.mrf.mxu0
  %v236 = vadd.f32 0.0, %v235
  %v237 = vpop.f32.mrf.mxu0
  %238 = vmatprep.mubr.bf16.mxu0 0
  %239 = vmatmul.mubr.bf16.gmra.mxu0 %v114
  %v240 = vpop.f32.mrf.mxu0
  %v241 = vadd.f32 0.0, %v240
  %v242 = vpop.f32.mrf.mxu0
  %v243 = vpop.f32.mrf.mxu0
  %v244 = vadd.f32 0.0, %v243
  %v245 = vpop.f32.mrf.mxu0
  %246 = vmatprep.mubr.bf16.mxu0 0
  %247 = vmatmul.mubr.bf16.gmra.mxu0 %v115
  %v248 = vpop.f32.mrf.mxu0
  %v249 = vadd.f32 0.0, %v248
  %v250 = vpop.f32.mrf.mxu0
  %v251 = vpop.f32.mrf.mxu0
  %v252 = vadd.f32 0.0, %v251
  %v253 = vpop.f32.mrf.mxu0
  %254 = vmatprep.mubr.bf16.mxu0 0
  %255 = vmatmul.mubr.bf16.gmra.mxu0 %v116
  %v256 = vpop.f32.mrf.mxu0
  %v257 = vadd.f32 0.0, %v256
  %v258 = vpop.f32.mrf.mxu0
  %v259 = vpop.f32.mrf.mxu0
  %v260 = vadd.f32 0.0, %v259
  %v261 = vpop.f32.mrf.mxu0
  %262 = vmatprep.mubr.bf16.mxu0 0
  %263 = vmatmul.mubr.bf16.gmra.mxu0 %v117
  %v264 = vpop.f32.mrf.mxu0
  %v265 = vadd.f32 0.0, %v264
  %v266 = vpop.f32.mrf.mxu0
  %v267 = vpop.f32.mrf.mxu0
  %v268 = vadd.f32 0.0, %v267
  %v269 = vpop.f32.mrf.mxu0
  %270 = vdwg.mxu0
  %v271 = vpack.c.bf16 %v212, %v209
  %v272 = vpack.c.bf16 %v220, %v217
  %v273 = vpack.c.bf16 %v228, %v225
  %v274 = vpack.c.bf16 %v236, %v233
  %v275 = vpack.c.bf16 %v244, %v241
  %v276 = vpack.c.bf16 %v252, %v249
  %v277 = vpack.c.bf16 %v260, %v257
  %v278 = vpack.c.bf16 %v268, %v265
  %v279 = vld [vmem:[%s5] sm:$0x1]
  %v281 = vlaneseq
  %v282 = vshrl.u32 %v281, 7
  %v283 = vsub.s32 0, %v282
  %v284 = vrot.slane %v279, %v283
  %v302 = vunpack.c.l.b16 %v30
  %v303 = vunpack.c.l.b16 %v31
  %v304 = vunpack.c.l.b16 %v32
  %v305 = vunpack.c.l.b16 %v33
  %v306 = vunpack.c.l.b16 %v34
  %v307 = vunpack.c.l.b16 %v35
  %v308 = vunpack.c.l.b16 %v36
  %v309 = vunpack.c.l.b16 %v37
  %v310 = vunpack.c.l.b16 %v38
  %v311 = vunpack.c.l.b16 %v39
  %v312 = vunpack.c.l.b16 %v40
  %v313 = vunpack.c.l.b16 %v41
  %v314 = vunpack.c.l.b16 %v42
  %v315 = vunpack.c.l.b16 %v43
  %v316 = vunpack.c.l.b16 %v44
  %v317 = vunpack.c.l.b16 %v45
  %v318 = vpack.c.b16 %v303, %v302
  %v319 = vpack.c.b16 %v305, %v304
  %v320 = vpack.c.b16 %v307, %v306
  %v321 = vpack.c.b16 %v309, %v308
  %v322 = vpack.c.b16 %v311, %v310
  %v323 = vpack.c.b16 %v313, %v312
  %v324 = vpack.c.b16 %v315, %v314
  %v325 = vpack.c.b16 %v317, %v316
  %334 = vmatprep.subr.bf16.mxu0 0
  %335 = vmatpush1.bf16.msra.mxu0 %v278
  %336 = vmatprep.subr.bf16.mxu0 0
  %337 = vmatpush1.bf16.msra.mxu0 %v277
  %338 = vmatprep.subr.bf16.mxu0 0
  %339 = vmatpush1.bf16.msra.mxu0 %v276
  %340 = vmatprep.subr.bf16.mxu0 0
  %341 = vmatpush1.bf16.msra.mxu0 %v275
  %342 = vmatprep.subr.bf16.mxu0 0
  %343 = vmatpush1.bf16.msra.mxu0 %v274
  %344 = vmatprep.subr.bf16.mxu0 0
  %345 = vmatpush1.bf16.msra.mxu0 %v273
  %346 = vmatprep.subr.bf16.mxu0 0
  %347 = vmatpush1.bf16.msra.mxu0 %v272
  %348 = vmatprep.subr.bf16.mxu0 0
  %349 = vmatpush1.bf16.msra.mxu0 %v271
  %350 = vmatprep.subr.bf16.mxu0 0
  %351 = vmatpush2.bf16.msra.mxu0 0
  %352 = vmatprep.subr.bf16.mxu0 0
  %353 = vmatpush2.bf16.msra.mxu0 0
  %354 = vmatprep.subr.bf16.mxu0 0
  %355 = vmatpush2.bf16.msra.mxu0 0
  %356 = vmatprep.subr.bf16.mxu0 0
  %357 = vmatpush2.bf16.msra.mxu0 0
  %358 = vmatprep.subr.bf16.mxu0 0
  %359 = vmatpush2.bf16.msra.mxu0 0
  %360 = vmatprep.subr.bf16.mxu0 0
  %361 = vmatpush2.bf16.msra.mxu0 0
  %362 = vmatprep.subr.bf16.mxu0 0
  %363 = vmatpush2.bf16.msra.mxu0 0
  %364 = vmatprep.subr.bf16.mxu0 0
  %365 = vmatpush2.bf16.msra.mxu0 0
  %366 = vmatprep.mubr.bf16.mxu0 0
  %367 = vmatmul.mubr.bf16.gmra.mxu0 %v318
  %v368 = vpop.f32.mrf.mxu0
  %v369 = vadd.f32 %v284, %v368
  %v370 = vpop.f32.mrf.mxu0
  %v371 = vpop.f32.mrf.mxu0
  %v372 = vadd.f32 %v284, %v371
  %v373 = vpop.f32.mrf.mxu0
  %374 = vmatprep.mubr.bf16.mxu0 0
  %375 = vmatmul.mubr.bf16.gmra.mxu0 %v319
  %v376 = vpop.f32.mrf.mxu0
  %v377 = vadd.f32 %v284, %v376
  %v378 = vpop.f32.mrf.mxu0
  %v379 = vpop.f32.mrf.mxu0
  %v380 = vadd.f32 %v284, %v379
  %v381 = vpop.f32.mrf.mxu0
  %382 = vmatprep.mubr.bf16.mxu0 0
  %383 = vmatmul.mubr.bf16.gmra.mxu0 %v320
  %v384 = vpop.f32.mrf.mxu0
  %v385 = vadd.f32 %v284, %v384
  %v386 = vpop.f32.mrf.mxu0
  %v387 = vpop.f32.mrf.mxu0
  %v388 = vadd.f32 %v284, %v387
  %v389 = vpop.f32.mrf.mxu0
  %390 = vmatprep.mubr.bf16.mxu0 0
  %391 = vmatmul.mubr.bf16.gmra.mxu0 %v321
  %v392 = vpop.f32.mrf.mxu0
  %v393 = vadd.f32 %v284, %v392
  %v394 = vpop.f32.mrf.mxu0
  %v395 = vpop.f32.mrf.mxu0
  %v396 = vadd.f32 %v284, %v395
  %v397 = vpop.f32.mrf.mxu0
  %398 = vmatprep.mubr.bf16.mxu0 0
  %399 = vmatmul.mubr.bf16.gmra.mxu0 %v322
  %v400 = vpop.f32.mrf.mxu0
  %v401 = vadd.f32 %v284, %v400
  %v402 = vpop.f32.mrf.mxu0
  %v403 = vpop.f32.mrf.mxu0
  %v404 = vadd.f32 %v284, %v403
  %v405 = vpop.f32.mrf.mxu0
  %406 = vmatprep.mubr.bf16.mxu0 0
  %407 = vmatmul.mubr.bf16.gmra.mxu0 %v323
  %v408 = vpop.f32.mrf.mxu0
  %v409 = vadd.f32 %v284, %v408
  %v410 = vpop.f32.mrf.mxu0
  %v411 = vpop.f32.mrf.mxu0
  %v412 = vadd.f32 %v284, %v411
  %v413 = vpop.f32.mrf.mxu0
  %414 = vmatprep.mubr.bf16.mxu0 0
  %415 = vmatmul.mubr.bf16.gmra.mxu0 %v324
  %v416 = vpop.f32.mrf.mxu0
  %v417 = vadd.f32 %v284, %v416
  %v418 = vpop.f32.mrf.mxu0
  %v419 = vpop.f32.mrf.mxu0
  %v420 = vadd.f32 %v284, %v419
  %v421 = vpop.f32.mrf.mxu0
  %422 = vmatprep.mubr.bf16.mxu0 0
  %423 = vmatmul.mubr.bf16.gmra.mxu0 %v325
  %v424 = vpop.f32.mrf.mxu0
  %v425 = vadd.f32 %v284, %v424
  %v426 = vpop.f32.mrf.mxu0
  %v427 = vpop.f32.mrf.mxu0
  %v428 = vadd.f32 %v284, %v427
  %v429 = vpop.f32.mrf.mxu0
  %430 = vdwg.mxu0
  %v431 = vmax.f32 %v369, 0.0
  %v432 = vmax.f32 %v372, 0.0
  %v433 = vmax.f32 %v377, 0.0
  %v434 = vmax.f32 %v380, 0.0
  %v435 = vmax.f32 %v385, 0.0
  %v436 = vmax.f32 %v388, 0.0
  %v437 = vmax.f32 %v393, 0.0
  %v438 = vmax.f32 %v396, 0.0
  %v439 = vmax.f32 %v401, 0.0
  %v440 = vmax.f32 %v404, 0.0
  %v441 = vmax.f32 %v409, 0.0
  %v442 = vmax.f32 %v412, 0.0
  %v443 = vmax.f32 %v417, 0.0
  %v444 = vmax.f32 %v420, 0.0
  %v445 = vmax.f32 %v425, 0.0
  %v446 = vmax.f32 %v428, 0.0
  %v447 = vpack.c.bf16 %v432, %v431
  %v448 = vpack.c.bf16 %v434, %v433
  %v449 = vpack.c.bf16 %v436, %v435
  %v450 = vpack.c.bf16 %v438, %v437
  %v451 = vpack.c.bf16 %v440, %v439
  %v452 = vpack.c.bf16 %v442, %v441
  %v453 = vpack.c.bf16 %v444, %v443
  %v454 = vpack.c.bf16 %v446, %v445
  %v455 = vld [vmem:[%s3] sm:$0xf]
  %v456 = vld [vmem:[%s3 + $0x4] sm:$0xf]
  %v457 = vld [vmem:[%s3 + $0x8] sm:$0xf]
  %v458 = vld [vmem:[%s3 + $0xc] sm:$0xf]
  %v459 = vld [vmem:[%s3 + $0x10] sm:$0xf]
  %v460 = vld [vmem:[%s3 + $0x14] sm:$0xf]
  %v461 = vld [vmem:[%s3 + $0x18] sm:$0xf]
  %v462 = vld [vmem:[%s3 + $0x1c] sm:$0xf]
  %v463 = vld [vmem:[%s3 + $0x20] sm:$0xf]
  %v464 = vld [vmem:[%s3 + $0x24] sm:$0xf]
  %v465 = vld [vmem:[%s3 + $0x28] sm:$0xf]
  %v466 = vld [vmem:[%s3 + $0x2c] sm:$0xf]
  %v467 = vld [vmem:[%s3 + $0x30] sm:$0xf]
  %v468 = vld [vmem:[%s3 + $0x34] sm:$0xf]
  %v469 = vld [vmem:[%s3 + $0x38] sm:$0xf]
  %v470 = vld [vmem:[%s3 + $0x3c] sm:$0xf]
  %v487 = vunpack.c.l.b16 %v455
  %v488 = vunpack.c.l.b16 %v456
  %v489 = vunpack.c.l.b16 %v457
  %v490 = vunpack.c.l.b16 %v458
  %v491 = vunpack.c.l.b16 %v459
  %v492 = vunpack.c.l.b16 %v460
  %v493 = vunpack.c.l.b16 %v461
  %v494 = vunpack.c.l.b16 %v462
  %v495 = vunpack.c.l.b16 %v463
  %v496 = vunpack.c.l.b16 %v464
  %v497 = vunpack.c.l.b16 %v465
  %v498 = vunpack.c.l.b16 %v466
  %v499 = vunpack.c.l.b16 %v467
  %v500 = vunpack.c.l.b16 %v468
  %v501 = vunpack.c.l.b16 %v469
  %v502 = vunpack.c.l.b16 %v470
  %v503 = vpack.c.b16 %v488, %v487
  %v504 = vpack.c.b16 %v490, %v489
  %v505 = vpack.c.b16 %v492, %v491
  %v506 = vpack.c.b16 %v494, %v493
  %v507 = vpack.c.b16 %v496, %v495
  %v508 = vpack.c.b16 %v498, %v497
  %v509 = vpack.c.b16 %v500, %v499
  %v510 = vpack.c.b16 %v502, %v501
  %519 = vmatprep.subr.bf16.mxu0 0
  %520 = vmatpush1.bf16.msra.mxu0 %v510
  %521 = vmatprep.subr.bf16.mxu0 0
  %522 = vmatpush1.bf16.msra.mxu0 %v509
  %523 = vmatprep.subr.bf16.mxu0 0
  %524 = vmatpush1.bf16.msra.mxu0 %v508
  %525 = vmatprep.subr.bf16.mxu0 0
  %526 = vmatpush1.bf16.msra.mxu0 %v507
  %527 = vmatprep.subr.bf16.mxu0 0
  %528 = vmatpush1.bf16.msra.mxu0 %v506
  %529 = vmatprep.subr.bf16.mxu0 0
  %530 = vmatpush1.bf16.msra.mxu0 %v505
  %531 = vmatprep.subr.bf16.mxu0 0
  %532 = vmatpush1.bf16.msra.mxu0 %v504
  %533 = vmatprep.subr.bf16.mxu0 0
  %534 = vmatpush1.bf16.msra.mxu0 %v503
  %535 = vmatprep.subr.bf16.mxu0 0
  %536 = vmatpush2.bf16.msra.mxu0 0
  %537 = vmatprep.subr.bf16.mxu0 0
  %538 = vmatpush2.bf16.msra.mxu0 0
  %539 = vmatprep.subr.bf16.mxu0 0
  %540 = vmatpush2.bf16.msra.mxu0 0
  %541 = vmatprep.subr.bf16.mxu0 0
  %542 = vmatpush2.bf16.msra.mxu0 0
  %543 = vmatprep.subr.bf16.mxu0 0
  %544 = vmatpush2.bf16.msra.mxu0 0
  %545 = vmatprep.subr.bf16.mxu0 0
  %546 = vmatpush2.bf16.msra.mxu0 0
  %547 = vmatprep.subr.bf16.mxu0 0
  %548 = vmatpush2.bf16.msra.mxu0 0
  %549 = vmatprep.subr.bf16.mxu0 0
  %550 = vmatpush2.bf16.msra.mxu0 0
  %551 = vmatprep.mubr.bf16.mxu0 0
  %552 = vmatmul.mubr.bf16.gmra.mxu0 %v447
  %v553 = vpop.f32.mrf.mxu0
  %v554 = vadd.f32 0.0, %v553
  %v555 = vpop.f32.mrf.mxu0
  %v556 = vpop.f32.mrf.mxu0
  %v557 = vadd.f32 0.0, %v556
  %v558 = vpop.f32.mrf.mxu0
  %559 = vmatprep.mubr.bf16.mxu0 0
  %560 = vmatmul.mubr.bf16.gmra.mxu0 %v448
  %v561 = vpop.f32.mrf.mxu0
  %v562 = vadd.f32 0.0, %v561
  %v563 = vpop.f32.mrf.mxu0
  %v564 = vpop.f32.mrf.mxu0
  %v565 = vadd.f32 0.0, %v564
  %v566 = vpop.f32.mrf.mxu0
  %567 = vmatprep.mubr.bf16.mxu0 0
  %568 = vmatmul.mubr.bf16.gmra.mxu0 %v449
  %v569 = vpop.f32.mrf.mxu0
  %v570 = vadd.f32 0.0, %v569
  %v571 = vpop.f32.mrf.mxu0
  %v572 = vpop.f32.mrf.mxu0
  %v573 = vadd.f32 0.0, %v572
  %v574 = vpop.f32.mrf.mxu0
  %575 = vmatprep.mubr.bf16.mxu0 0
  %576 = vmatmul.mubr.bf16.gmra.mxu0 %v450
  %v577 = vpop.f32.mrf.mxu0
  %v578 = vadd.f32 0.0, %v577
  %v579 = vpop.f32.mrf.mxu0
  %v580 = vpop.f32.mrf.mxu0
  %v581 = vadd.f32 0.0, %v580
  %v582 = vpop.f32.mrf.mxu0
  %583 = vmatprep.mubr.bf16.mxu0 0
  %584 = vmatmul.mubr.bf16.gmra.mxu0 %v451
  %v585 = vpop.f32.mrf.mxu0
  %v586 = vadd.f32 0.0, %v585
  %v587 = vpop.f32.mrf.mxu0
  %v588 = vpop.f32.mrf.mxu0
  %v589 = vadd.f32 0.0, %v588
  %v590 = vpop.f32.mrf.mxu0
  %591 = vmatprep.mubr.bf16.mxu0 0
  %592 = vmatmul.mubr.bf16.gmra.mxu0 %v452
  %v593 = vpop.f32.mrf.mxu0
  %v594 = vadd.f32 0.0, %v593
  %v595 = vpop.f32.mrf.mxu0
  %v596 = vpop.f32.mrf.mxu0
  %v597 = vadd.f32 0.0, %v596
  %v598 = vpop.f32.mrf.mxu0
  %599 = vmatprep.mubr.bf16.mxu0 0
  %600 = vmatmul.mubr.bf16.gmra.mxu0 %v453
  %v601 = vpop.f32.mrf.mxu0
  %v602 = vadd.f32 0.0, %v601
  %v603 = vpop.f32.mrf.mxu0
  %v604 = vpop.f32.mrf.mxu0
  %v605 = vadd.f32 0.0, %v604
  %v606 = vpop.f32.mrf.mxu0
  %607 = vmatprep.mubr.bf16.mxu0 0
  %608 = vmatmul.mubr.bf16.gmra.mxu0 %v454
  %v609 = vpop.f32.mrf.mxu0
  %v610 = vadd.f32 0.0, %v609
  %v611 = vpop.f32.mrf.mxu0
  %v612 = vpop.f32.mrf.mxu0
  %v613 = vadd.f32 0.0, %v612
  %v614 = vpop.f32.mrf.mxu0
  %615 = vdwg.mxu0
  %v616 = vpack.c.bf16 %v557, %v554
  %v617 = vpack.c.bf16 %v565, %v562
  %v618 = vpack.c.bf16 %v573, %v570
  %v619 = vpack.c.bf16 %v581, %v578
  %v620 = vpack.c.bf16 %v589, %v586
  %v621 = vpack.c.bf16 %v597, %v594
  %v622 = vpack.c.bf16 %v605, %v602
  %v623 = vpack.c.bf16 %v613, %v610
  %v624 = vld [vmem:[%s6] sm:$0x1]
  %v626 = vlaneseq
  %v627 = vshrl.u32 %v626, 7
  %v628 = vsub.s32 0, %v627
  %v629 = vrot.slane %v624, %v628
  %631 = vmatprep.subr.bf16.mxu0 0
  %632 = vmatpush1.bf16.msra.mxu0 %v623
  %633 = vmatprep.subr.bf16.mxu0 0
  %634 = vmatpush1.bf16.msra.mxu0 %v622
  %635 = vmatprep.subr.bf16.mxu0 0
  %636 = vmatpush1.bf16.msra.mxu0 %v621
  %637 = vmatprep.subr.bf16.mxu0 0
  %638 = vmatpush1.bf16.msra.mxu0 %v620
  %639 = vmatprep.subr.bf16.mxu0 0
  %640 = vmatpush1.bf16.msra.mxu0 %v619
  %641 = vmatprep.subr.bf16.mxu0 0
  %642 = vmatpush1.bf16.msra.mxu0 %v618
  %643 = vmatprep.subr.bf16.mxu0 0
  %644 = vmatpush1.bf16.msra.mxu0 %v617
  %645 = vmatprep.subr.bf16.mxu0 0
  %646 = vmatpush1.bf16.msra.mxu0 %v616
  %647 = vmatprep.subr.bf16.mxu0 0
  %648 = vmatpush2.bf16.msra.mxu0 0
  %649 = vmatprep.subr.bf16.mxu0 0
  %650 = vmatpush2.bf16.msra.mxu0 0
  %651 = vmatprep.subr.bf16.mxu0 0
  %652 = vmatpush2.bf16.msra.mxu0 0
  %653 = vmatprep.subr.bf16.mxu0 0
  %654 = vmatpush2.bf16.msra.mxu0 0
  %655 = vmatprep.subr.bf16.mxu0 0
  %656 = vmatpush2.bf16.msra.mxu0 0
  %657 = vmatprep.subr.bf16.mxu0 0
  %658 = vmatpush2.bf16.msra.mxu0 0
  %659 = vmatprep.subr.bf16.mxu0 0
  %660 = vmatpush2.bf16.msra.mxu0 0
  %661 = vmatprep.subr.bf16.mxu0 0
  %662 = vmatpush2.bf16.msra.mxu0 0
  %663 = vmatprep.mubr.bf16.mxu0 0
  %664 = vmatmul.mubr.bf16.gmra.mxu0 %v318
  %v665 = vpop.f32.mrf.mxu0
  %v666 = vadd.f32 %v629, %v665
  %v667 = vpop.f32.mrf.mxu0
  %v668 = vpop.f32.mrf.mxu0
  %v669 = vadd.f32 %v629, %v668
  %v670 = vpop.f32.mrf.mxu0
  %671 = vmatprep.mubr.bf16.mxu0 0
  %672 = vmatmul.mubr.bf16.gmra.mxu0 %v319
  %v673 = vpop.f32.mrf.mxu0
  %v674 = vadd.f32 %v629, %v673
  %v675 = vpop.f32.mrf.mxu0
  %v676 = vpop.f32.mrf.mxu0
  %v677 = vadd.f32 %v629, %v676
  %v678 = vpop.f32.mrf.mxu0
  %679 = vmatprep.mubr.bf16.mxu0 0
  %680 = vmatmul.mubr.bf16.gmra.mxu0 %v320
  %v681 = vpop.f32.mrf.mxu0
  %v682 = vadd.f32 %v629, %v681
  %v683 = vpop.f32.mrf.mxu0
  %v684 = vpop.f32.mrf.mxu0
  %v685 = vadd.f32 %v629, %v684
  %v686 = vpop.f32.mrf.mxu0
  %687 = vmatprep.mubr.bf16.mxu0 0
  %688 = vmatmul.mubr.bf16.gmra.mxu0 %v321
  %v689 = vpop.f32.mrf.mxu0
  %v690 = vadd.f32 %v629, %v689
  %v691 = vpop.f32.mrf.mxu0
  %v692 = vpop.f32.mrf.mxu0
  %v693 = vadd.f32 %v629, %v692
  %v694 = vpop.f32.mrf.mxu0
  %695 = vmatprep.mubr.bf16.mxu0 0
  %696 = vmatmul.mubr.bf16.gmra.mxu0 %v322
  %v697 = vpop.f32.mrf.mxu0
  %v698 = vadd.f32 %v629, %v697
  %v699 = vpop.f32.mrf.mxu0
  %v700 = vpop.f32.mrf.mxu0
  %v701 = vadd.f32 %v629, %v700
  %v702 = vpop.f32.mrf.mxu0
  %703 = vmatprep.mubr.bf16.mxu0 0
  %704 = vmatmul.mubr.bf16.gmra.mxu0 %v323
  %v705 = vpop.f32.mrf.mxu0
  %v706 = vadd.f32 %v629, %v705
  %v707 = vpop.f32.mrf.mxu0
  %v708 = vpop.f32.mrf.mxu0
  %v709 = vadd.f32 %v629, %v708
  %v710 = vpop.f32.mrf.mxu0
  %711 = vmatprep.mubr.bf16.mxu0 0
  %712 = vmatmul.mubr.bf16.gmra.mxu0 %v324
  %v713 = vpop.f32.mrf.mxu0
  %v714 = vadd.f32 %v629, %v713
  %v715 = vpop.f32.mrf.mxu0
  %v716 = vpop.f32.mrf.mxu0
  %v717 = vadd.f32 %v629, %v716
  %v718 = vpop.f32.mrf.mxu0
  %719 = vmatprep.mubr.bf16.mxu0 0
  %720 = vmatmul.mubr.bf16.gmra.mxu0 %v325
  %v721 = vpop.f32.mrf.mxu0
  %v722 = vadd.f32 %v629, %v721
  %v723 = vpop.f32.mrf.mxu0
  %v724 = vpop.f32.mrf.mxu0
  %v725 = vadd.f32 %v629, %v724
  %v726 = vpop.f32.mrf.mxu0
  %727 = vdwg.mxu0
  %v728 = vmax.f32 %v666, 0.0
  %v729 = vmax.f32 %v669, 0.0
  %v730 = vmax.f32 %v674, 0.0
  %v731 = vmax.f32 %v677, 0.0
  %v732 = vmax.f32 %v682, 0.0
  %v733 = vmax.f32 %v685, 0.0
  %v734 = vmax.f32 %v690, 0.0
  %v735 = vmax.f32 %v693, 0.0
  %v736 = vmax.f32 %v698, 0.0
  %v737 = vmax.f32 %v701, 0.0
  %v738 = vmax.f32 %v706, 0.0
  %v739 = vmax.f32 %v709, 0.0
  %v740 = vmax.f32 %v714, 0.0
  %v741 = vmax.f32 %v717, 0.0
  %v742 = vmax.f32 %v722, 0.0
  %v743 = vmax.f32 %v725, 0.0
  %v744 = vpack.c.bf16 %v729, %v728
  %v745 = vpack.c.bf16 %v731, %v730
  %v746 = vpack.c.bf16 %v733, %v732
  %v747 = vpack.c.bf16 %v735, %v734
  %v748 = vpack.c.bf16 %v737, %v736
  %v749 = vpack.c.bf16 %v739, %v738
  %v750 = vpack.c.bf16 %v741, %v740
  %v751 = vpack.c.bf16 %v743, %v742
  %v752 = vld [vmem:[%s4] sm:$0xf]
  %v753 = vld [vmem:[%s4 + $0x4] sm:$0xf]
  %v754 = vld [vmem:[%s4 + $0x8] sm:$0xf]
  %v755 = vld [vmem:[%s4 + $0xc] sm:$0xf]
  %v756 = vld [vmem:[%s4 + $0x10] sm:$0xf]
  %v757 = vld [vmem:[%s4 + $0x14] sm:$0xf]
  %v758 = vld [vmem:[%s4 + $0x18] sm:$0xf]
  %v759 = vld [vmem:[%s4 + $0x1c] sm:$0xf]
  %v760 = vld [vmem:[%s4 + $0x20] sm:$0xf]
  %v761 = vld [vmem:[%s4 + $0x24] sm:$0xf]
  %v762 = vld [vmem:[%s4 + $0x28] sm:$0xf]
  %v763 = vld [vmem:[%s4 + $0x2c] sm:$0xf]
  %v764 = vld [vmem:[%s4 + $0x30] sm:$0xf]
  %v765 = vld [vmem:[%s4 + $0x34] sm:$0xf]
  %v766 = vld [vmem:[%s4 + $0x38] sm:$0xf]
  %v767 = vld [vmem:[%s4 + $0x3c] sm:$0xf]
  %v784 = vunpack.c.l.b16 %v752
  %v785 = vunpack.c.l.b16 %v753
  %v786 = vunpack.c.l.b16 %v754
  %v787 = vunpack.c.l.b16 %v755
  %v788 = vunpack.c.l.b16 %v756
  %v789 = vunpack.c.l.b16 %v757
  %v790 = vunpack.c.l.b16 %v758
  %v791 = vunpack.c.l.b16 %v759
  %v792 = vunpack.c.l.b16 %v760
  %v793 = vunpack.c.l.b16 %v761
  %v794 = vunpack.c.l.b16 %v762
  %v795 = vunpack.c.l.b16 %v763
  %v796 = vunpack.c.l.b16 %v764
  %v797 = vunpack.c.l.b16 %v765
  %v798 = vunpack.c.l.b16 %v766
  %v799 = vunpack.c.l.b16 %v767
  %v800 = vpack.c.b16 %v785, %v784
  %v801 = vpack.c.b16 %v787, %v786
  %v802 = vpack.c.b16 %v789, %v788
  %v803 = vpack.c.b16 %v791, %v790
  %v804 = vpack.c.b16 %v793, %v792
  %v805 = vpack.c.b16 %v795, %v794
  %v806 = vpack.c.b16 %v797, %v796
  %v807 = vpack.c.b16 %v799, %v798
  %816 = vmatprep.subr.bf16.mxu0 0
  %817 = vmatpush1.bf16.msra.mxu0 %v807
  %818 = vmatprep.subr.bf16.mxu0 0
  %819 = vmatpush1.bf16.msra.mxu0 %v806
  %820 = vmatprep.subr.bf16.mxu0 0
  %821 = vmatpush1.bf16.msra.mxu0 %v805
  %822 = vmatprep.subr.bf16.mxu0 0
  %823 = vmatpush1.bf16.msra.mxu0 %v804
  %824 = vmatprep.subr.bf16.mxu0 0
  %825 = vmatpush1.bf16.msra.mxu0 %v803
  %826 = vmatprep.subr.bf16.mxu0 0
  %827 = vmatpush1.bf16.msra.mxu0 %v802
  %828 = vmatprep.subr.bf16.mxu0 0
  %829 = vmatpush1.bf16.msra.mxu0 %v801
  %830 = vmatprep.subr.bf16.mxu0 0
  %831 = vmatpush1.bf16.msra.mxu0 %v800
  %832 = vmatprep.subr.bf16.mxu0 0
  %833 = vmatpush2.bf16.msra.mxu0 0
  %834 = vmatprep.subr.bf16.mxu0 0
  %835 = vmatpush2.bf16.msra.mxu0 0
  %836 = vmatprep.subr.bf16.mxu0 0
  %837 = vmatpush2.bf16.msra.mxu0 0
  %838 = vmatprep.subr.bf16.mxu0 0
  %839 = vmatpush2.bf16.msra.mxu0 0
  %840 = vmatprep.subr.bf16.mxu0 0
  %841 = vmatpush2.bf16.msra.mxu0 0
  %842 = vmatprep.subr.bf16.mxu0 0
  %843 = vmatpush2.bf16.msra.mxu0 0
  %844 = vmatprep.subr.bf16.mxu0 0
  %845 = vmatpush2.bf16.msra.mxu0 0
  %846 = vmatprep.subr.bf16.mxu0 0
  %847 = vmatpush2.bf16.msra.mxu0 0
  %848 = vmatprep.mubr.bf16.mxu0 0
  %849 = vmatmul.mubr.bf16.gmra.mxu0 %v744
  %v850 = vpop.f32.mrf.mxu0
  %v851 = vadd.f32 0.0, %v850
  %v852 = vpop.f32.mrf.mxu0
  %v853 = vpop.f32.mrf.mxu0
  %v854 = vadd.f32 0.0, %v853
  %v855 = vpop.f32.mrf.mxu0
  %856 = vmatprep.mubr.bf16.mxu0 0
  %857 = vmatmul.mubr.bf16.gmra.mxu0 %v745
  %v858 = vpop.f32.mrf.mxu0
  %v859 = vadd.f32 0.0, %v858
  %v860 = vpop.f32.mrf.mxu0
  %v861 = vpop.f32.mrf.mxu0
  %v862 = vadd.f32 0.0, %v861
  %v863 = vpop.f32.mrf.mxu0
  %864 = vmatprep.mubr.bf16.mxu0 0
  %865 = vmatmul.mubr.bf16.gmra.mxu0 %v746
  %v866 = vpop.f32.mrf.mxu0
  %v867 = vadd.f32 0.0, %v866
  %v868 = vpop.f32.mrf.mxu0
  %v869 = vpop.f32.mrf.mxu0
  %v870 = vadd.f32 0.0, %v869
  %v871 = vpop.f32.mrf.mxu0
  %872 = vmatprep.mubr.bf16.mxu0 0
  %873 = vmatmul.mubr.bf16.gmra.mxu0 %v747
  %v874 = vpop.f32.mrf.mxu0
  %v875 = vadd.f32 0.0, %v874
  %v876 = vpop.f32.mrf.mxu0
  %v877 = vpop.f32.mrf.mxu0
  %v878 = vadd.f32 0.0, %v877
  %v879 = vpop.f32.mrf.mxu0
  %880 = vmatprep.mubr.bf16.mxu0 0
  %881 = vmatmul.mubr.bf16.gmra.mxu0 %v748
  %v882 = vpop.f32.mrf.mxu0
  %v883 = vadd.f32 0.0, %v882
  %v884 = vpop.f32.mrf.mxu0
  %v885 = vpop.f32.mrf.mxu0
  %v886 = vadd.f32 0.0, %v885
  %v887 = vpop.f32.mrf.mxu0
  %888 = vmatprep.mubr.bf16.mxu0 0
  %889 = vmatmul.mubr.bf16.gmra.mxu0 %v749
  %v890 = vpop.f32.mrf.mxu0
  %v891 = vadd.f32 0.0, %v890
  %v892 = vpop.f32.mrf.mxu0
  %v893 = vpop.f32.mrf.mxu0
  %v894 = vadd.f32 0.0, %v893
  %v895 = vpop.f32.mrf.mxu0
  %896 = vmatprep.mubr.bf16.mxu0 0
  %897 = vmatmul.mubr.bf16.gmra.mxu0 %v750
  %v898 = vpop.f32.mrf.mxu0
  %v899 = vadd.f32 0.0, %v898
  %v900 = vpop.f32.mrf.mxu0
  %v901 = vpop.f32.mrf.mxu0
  %v902 = vadd.f32 0.0, %v901
  %v903 = vpop.f32.mrf.mxu0
  %904 = vmatprep.mubr.bf16.mxu0 0
  %905 = vmatmul.mubr.bf16.gmra.mxu0 %v751
  %v906 = vpop.f32.mrf.mxu0
  %v907 = vadd.f32 0.0, %v906
  %v908 = vpop.f32.mrf.mxu0
  %v909 = vpop.f32.mrf.mxu0
  %v910 = vadd.f32 0.0, %v909
  %v911 = vpop.f32.mrf.mxu0
  %912 = vdwg.mxu0
  %v913 = vpack.c.bf16 %v854, %v851
  %v914 = vpack.c.bf16 %v862, %v859
  %v915 = vpack.c.bf16 %v870, %v867
  %v916 = vpack.c.bf16 %v878, %v875
  %v917 = vpack.c.bf16 %v886, %v883
  %v918 = vpack.c.bf16 %v894, %v891
  %v919 = vpack.c.bf16 %v902, %v899
  %v920 = vpack.c.bf16 %v910, %v907
  %v921 = vld [vmem:[%s7] sm:$0x1]
  %v923 = vlaneseq
  %v924 = vshrl.u32 %v923, 7
  %v925 = vsub.s32 0, %v924
  %v926 = vrot.slane %v921, %v925
  %928 = vmatprep.subr.bf16.mxu0 0
  %929 = vmatpush1.bf16.msra.mxu0 %v920
  %930 = vmatprep.subr.bf16.mxu0 0
  %931 = vmatpush1.bf16.msra.mxu0 %v919
  %932 = vmatprep.subr.bf16.mxu0 0
  %933 = vmatpush1.bf16.msra.mxu0 %v918
  %934 = vmatprep.subr.bf16.mxu0 0
  %935 = vmatpush1.bf16.msra.mxu0 %v917
  %936 = vmatprep.subr.bf16.mxu0 0
  %937 = vmatpush1.bf16.msra.mxu0 %v916
  %938 = vmatprep.subr.bf16.mxu0 0
  %939 = vmatpush1.bf16.msra.mxu0 %v915
  %940 = vmatprep.subr.bf16.mxu0 0
  %941 = vmatpush1.bf16.msra.mxu0 %v914
  %942 = vmatprep.subr.bf16.mxu0 0
  %943 = vmatpush1.bf16.msra.mxu0 %v913
  %944 = vmatprep.subr.bf16.mxu0 0
  %945 = vmatpush2.bf16.msra.mxu0 0
  %946 = vmatprep.subr.bf16.mxu0 0
  %947 = vmatpush2.bf16.msra.mxu0 0
  %948 = vmatprep.subr.bf16.mxu0 0
  %949 = vmatpush2.bf16.msra.mxu0 0
  %950 = vmatprep.subr.bf16.mxu0 0
  %951 = vmatpush2.bf16.msra.mxu0 0
  %952 = vmatprep.subr.bf16.mxu0 0
  %953 = vmatpush2.bf16.msra.mxu0 0
  %954 = vmatprep.subr.bf16.mxu0 0
  %955 = vmatpush2.bf16.msra.mxu0 0
  %956 = vmatprep.subr.bf16.mxu0 0
  %957 = vmatpush2.bf16.msra.mxu0 0
  %958 = vmatprep.subr.bf16.mxu0 0
  %959 = vmatpush2.bf16.msra.mxu0 0
  %960 = vmatprep.mubr.bf16.mxu0 0
  %961 = vmatmul.mubr.bf16.gmra.mxu0 %v318
  %v962 = vpop.f32.mrf.mxu0
  %v963 = vadd.f32 %v926, %v962
  %v964 = vpop.f32.mrf.mxu0
  %v965 = vpop.f32.mrf.mxu0
  %v966 = vadd.f32 %v926, %v965
  %v967 = vpop.f32.mrf.mxu0
  %968 = vmatprep.mubr.bf16.mxu0 0
  %969 = vmatmul.mubr.bf16.gmra.mxu0 %v319
  %v970 = vpop.f32.mrf.mxu0
  %v971 = vadd.f32 %v926, %v970
  %v972 = vpop.f32.mrf.mxu0
  %v973 = vpop.f32.mrf.mxu0
  %v974 = vadd.f32 %v926, %v973
  %v975 = vpop.f32.mrf.mxu0
  %976 = vmatprep.mubr.bf16.mxu0 0
  %977 = vmatmul.mubr.bf16.gmra.mxu0 %v320
  %v978 = vpop.f32.mrf.mxu0
  %v979 = vadd.f32 %v926, %v978
  %v980 = vpop.f32.mrf.mxu0
  %v981 = vpop.f32.mrf.mxu0
  %v982 = vadd.f32 %v926, %v981
  %v983 = vpop.f32.mrf.mxu0
  %984 = vmatprep.mubr.bf16.mxu0 0
  %985 = vmatmul.mubr.bf16.gmra.mxu0 %v321
  %v986 = vpop.f32.mrf.mxu0
  %v987 = vadd.f32 %v926, %v986
  %v988 = vpop.f32.mrf.mxu0
  %v989 = vpop.f32.mrf.mxu0
  %v990 = vadd.f32 %v926, %v989
  %v991 = vpop.f32.mrf.mxu0
  %992 = vmatprep.mubr.bf16.mxu0 0
  %993 = vmatmul.mubr.bf16.gmra.mxu0 %v322
  %v994 = vpop.f32.mrf.mxu0
  %v995 = vadd.f32 %v926, %v994
  %v996 = vpop.f32.mrf.mxu0
  %v997 = vpop.f32.mrf.mxu0
  %v998 = vadd.f32 %v926, %v997
  %v999 = vpop.f32.mrf.mxu0
  %1000 = vmatprep.mubr.bf16.mxu0 0
  %1001 = vmatmul.mubr.bf16.gmra.mxu0 %v323
  %v1002 = vpop.f32.mrf.mxu0
  %v1003 = vadd.f32 %v926, %v1002
  %v1004 = vpop.f32.mrf.mxu0
  %v1005 = vpop.f32.mrf.mxu0
  %v1006 = vadd.f32 %v926, %v1005
  %v1007 = vpop.f32.mrf.mxu0
  %1008 = vmatprep.mubr.bf16.mxu0 0
  %1009 = vmatmul.mubr.bf16.gmra.mxu0 %v324
  %v1010 = vpop.f32.mrf.mxu0
  %v1011 = vadd.f32 %v926, %v1010
  %v1012 = vpop.f32.mrf.mxu0
  %v1013 = vpop.f32.mrf.mxu0
  %v1014 = vadd.f32 %v926, %v1013
  %v1015 = vpop.f32.mrf.mxu0
  %1016 = vmatprep.mubr.bf16.mxu0 0
  %1017 = vmatmul.mubr.bf16.gmra.mxu0 %v325
  %v1018 = vpop.f32.mrf.mxu0
  %v1019 = vadd.f32 %v926, %v1018
  %v1020 = vpop.f32.mrf.mxu0
  %v1021 = vpop.f32.mrf.mxu0
  %v1022 = vadd.f32 %v926, %v1021
  %v1023 = vpop.f32.mrf.mxu0
  %1024 = vdwg.mxu0
  %1025 = vst [vmem:[%s8] sm:$0xff] %v963
  %1026 = vst [vmem:[%s8 + $0x8] sm:$0xff] %v966
  %1027 = vst [vmem:[%s8 + $0x10] sm:$0xff] %v971
  %1028 = vst [vmem:[%s8 + $0x18] sm:$0xff] %v974
  %1029 = vst [vmem:[%s8 + $0x20] sm:$0xff] %v979
  %1030 = vst [vmem:[%s8 + $0x28] sm:$0xff] %v982
  %1031 = vst [vmem:[%s8 + $0x30] sm:$0xff] %v987
  %1032 = vst [vmem:[%s8 + $0x38] sm:$0xff] %v990
  %1033 = vst [vmem:[%s8 + $0x40] sm:$0xff] %v995
  %1034 = vst [vmem:[%s8 + $0x48] sm:$0xff] %v998
  %1035 = vst [vmem:[%s8 + $0x50] sm:$0xff] %v1003
  %1036 = vst [vmem:[%s8 + $0x58] sm:$0xff] %v1006
  %1037 = vst [vmem:[%s8 + $0x60] sm:$0xff] %v1011
  %1038 = vst [vmem:[%s8 + $0x68] sm:$0xff] %v1014
  %1039 = vst [vmem:[%s8 + $0x70] sm:$0xff] %v1019
  %1040 = vst [vmem:[%s8 + $0x78] sm:$0xff] %v1022
  // Predicated region
  $region34: #{_gcn_forward_jit.1} parent=0 // pred_check
    _
  $region35: #{_gcn_forward_jit.1} parent=0 // pred_check_branch
    %1042 = sbr.rel (0) target = $region37
  $region36: #{_gcn_forward_jit.1} parent=0 // pred_region
    _
  $region37: #{_gcn_forward_jit.1} parent=0 // pred_fallthru
    _
  // Predicated region
  $region38: #{_gcn_forward_jit.1} parent=0 // pred_check
    _
  $region39: #{_gcn_forward_jit.1} parent=0 // pred_check_branch
    %1044 = sbr.rel (0) target = $region41
  $region40: #{_gcn_forward_jit.1} parent=0 // pred_region
    _
  $region41: #{_gcn_forward_jit.1} parent=0 // pred_fallthru
    _

</llo_original>
